<compile_context>
chip_gen: v7x
topology: tpu7x:2x2x1
jax: 0.10.0
libtpu: 0.0.40
codegen_flags: <defaults>
</compile_context>

<pallas_src>
import jax
import jax.numpy as jnp
from jax import lax
from jax.experimental import pallas as pl
from jax.experimental.pallas import tpu as pltpu

_LANES = 128  # TPU vreg lane width


def _energy_loss_kernel(margin, batch_size, b_tile):
    """Builds the per-tile partial hinge-sum kernel.

    Refs:
      out_ref : (b_tile, C) raw model outputs tile (any float dtype)
      tgt_ref : (b_tile, 1) int32 targets tile
      part_ref: (1, 128)   partial-sum output block (all lanes carry the same
                            value; the wrapper reads lane 0 of each tile).
    """

    def kernel(out_ref, tgt_ref, part_ref):
        x = out_ref[...].astype(jnp.float32)                      # (bt, C)
        bt, c = x.shape

        col = lax.broadcasted_iota(jnp.int32, (bt, c), 1)
        is_tgt = col == tgt_ref[...]                              # (bt, C)

        # Reduction 1: row-sum denominator (XLU).  Normalisation happens once
        # via a per-row reciprocal broadcast (VPU multiply has headroom).
        denom = jnp.sum(x, axis=1, keepdims=True) + 1e-6          # (bt, 1)
        inv = 1.0 / denom                                         # exact divide
        y = x * inv                                               # normalized tile

        # Reduction 2: exact target-energy extraction (single masked sum).
        tgt_e = jnp.sum(jnp.where(is_tgt, y, 0.0), axis=1, keepdims=True)
        # Reduction 3: non-target max with the target slot zeroed, exactly as
        # the reference's (outputs * mask).max(dim=1).
        non_tgt_e = jnp.max(jnp.where(is_tgt, 0.0, y), axis=1, keepdims=True)

        hinge = jnp.maximum(margin - tgt_e + non_tgt_e, 0.0)      # (bt, 1)

        # Mask ragged rows of the last tile so the mean uses exactly B rows.
        # (where picks 0.0 even if a garbage padded row produced inf/NaN.)
        row = lax.broadcasted_iota(jnp.int32, (bt, 1), 0)
        gid = pl.program_id(0) * b_tile + row
        hinge = jnp.where(gid < batch_size, hinge, 0.0)

        part_ref[...] = jnp.full((1, _LANES), jnp.sum(hinge), dtype=jnp.float32)

    return kernel


def _vmem_capacity_bytes():
    """Physical VMEM for this generation; conservative fallback (v7x = 64 MiB)."""
    try:
        return int(pltpu.get_tpu_info().vmem_capacity_bytes)
    except Exception:
        return 64 << 20


def _choose_b_tile(batch, num_classes, itemsize, vmem_cap):
    """Pick a batch tile sized per TPU generation.

    Budget the f32 working tile so that double-buffered inputs plus a few
    tile-sized f32 temporaries stay comfortably within physical VMEM:
    ~8 MiB f32-tile on v5e/v6e (128 MiB VMEM), ~5 MiB on v7x (64 MiB VMEM).
    """
    # Sublane packing multiple for the input dtype: 8 f32, 16 bf16, 32 int8.
    mult = max(8, 32 // max(int(itemsize), 1))
    if batch <= mult:
        return batch  # single full-batch tile (block == full dim is legal)

    budget_f32 = max(1 << 20, min(8 << 20, vmem_cap // 12))
    lane_c = max(num_classes, _LANES)        # lanes pad to 128
    rows = budget_f32 // (lane_c * 4)
    rows = max(mult, (rows // mult) * mult)

    # Keep at least two grid tiles when the batch allows it so the "parallel"
    # grid axis has work for both TensorCores on v7x (no-op on v5e/v6e).
    if batch >= 2 * mult:
        rows = min(rows, ((batch // 2) // mult) * mult)

    rows = min(rows, (batch // mult) * mult)  # never exceed the batch
    return max(rows, mult)


def energy_maximization_loss(outputs, targets, margin=1.0):
    """outputs: (B, C) float (f32 or bf16), targets: (B,) int -> scalar f32."""
    B, C = outputs.shape
    targets_2d = targets.astype(jnp.int32).reshape(B, 1)

    itemsize = jnp.dtype(outputs.dtype).itemsize
    vmem_cap = _vmem_capacity_bytes()
    b_tile = _choose_b_tile(B, C, itemsize, vmem_cap)
    num_tiles = pl.cdiv(B, b_tile)

    # VMEM limit: double-buffered inputs + ~6x tile of f32 temporaries + slack,
    # capped at 3/4 of physical VMEM for the current generation.
    lane_c = max(C, _LANES)
    in_tile = b_tile * lane_c * itemsize
    tgt_tile = b_tile * _LANES * 4
    f32_tile = b_tile * lane_c * 4
    est = 2 * (in_tile + tgt_tile) + 6 * f32_tile + (2 << 20)
    vmem_limit = int(min(max(est, 16 << 20), (vmem_cap * 3) // 4))

    partials = pl.pallas_call(
        _energy_loss_kernel(float(margin), B, b_tile),
        out_shape=jax.ShapeDtypeStruct((1, num_tiles * _LANES), jnp.float32),
        grid=(num_tiles,),
        in_specs=[
            pl.BlockSpec((b_tile, C), lambda i: (i, 0)),
            pl.BlockSpec((b_tile, 1), lambda i: (i, 0)),
        ],
        out_specs=pl.BlockSpec((1, _LANES), lambda i: (0, i)),
        compiler_params=pltpu.CompilerParams(
            dimension_semantics=("parallel",),
            vmem_limit_bytes=vmem_limit,
        ),
    )(outputs, targets_2d)

    # Tiny final reduction in plain JAX: one partial sum per tile (lane 0).
    per_tile = partials.reshape(num_tiles, _LANES)[:, 0]
    return jnp.sum(per_tile) / jnp.float32(B)


def _reference(outputs, targets, margin=1.0):
    outputs = outputs.astype(jnp.float32)
    outputs = outputs / (jnp.sum(outputs, axis=1, keepdims=True) + 1e-6)
    B = outputs.shape[0]
    target_energy = outputs[jnp.arange(B), targets]
    mask = jnp.ones_like(outputs).at[jnp.arange(B), targets].set(0.0)
    non_target_energy = jnp.max(outputs * mask, axis=1)
    return jnp.mean(jnp.maximum(margin - target_energy + non_target_energy, 0.0))


if __name__ == "__main__":
    key = jax.random.PRNGKey(0)
    k1, k2, k3, k4, k5, k6 = jax.random.split(key, 6)

    # Case 1: small, even batch (single full-batch tile).
    B, C = 8, 16
    outputs = jax.random.uniform(k1, (B, C), dtype=jnp.float32) + 0.1
    targets = jax.random.randint(k2, (B,), 0, C, dtype=jnp.int32)
    loss = jax.block_until_ready(energy_maximization_loss(outputs, targets, 1.0))
    ref = jax.block_until_ready(_reference(outputs, targets, 1.0))
    assert jnp.allclose(loss, ref, atol=1e-5, rtol=1e-5), (loss, ref)

    # Case 2: ragged batch (exercises the partial last tile + row masking).
    B2, C2 = 13, 16
    outputs2 = jax.random.uniform(k3, (B2, C2), dtype=jnp.float32) + 0.1
    targets2 = jax.random.randint(k4, (B2,), 0, C2, dtype=jnp.int32)
    loss2 = jax.block_until_ready(energy_maximization_loss(outputs2, targets2, 1.0))
    ref2 = jax.block_until_ready(_reference(outputs2, targets2, 1.0))
    assert jnp.allclose(loss2, ref2, atol=1e-5, rtol=1e-5), (loss2, ref2)

    # Case 3: bf16 inputs (recommended memory-bound feed), multi-tile grid.
    B3, C3 = 32, 10
    outputs3 = (jax.random.uniform(k5, (B3, C3), dtype=jnp.float32) + 0.1).astype(jnp.bfloat16)
    targets3 = jax.random.randint(k6, (B3,), 0, C3, dtype=jnp.int32)
    loss3 = jax.block_until_ready(energy_maximization_loss(outputs3, targets3, 1.0))
    ref3 = jax.block_until_ready(_reference(outputs3, targets3, 1.0))
    assert jnp.allclose(loss3, ref3, atol=1e-4, rtol=1e-4), (loss3, ref3)

    print("KERNEL_OK")
</pallas_src>

<mosaic_0001>
module attributes {stable_mosaic.version = 11 : i64} {
  func.func @kernel(%arg0: i32, %arg1: memref<8x16xf32, #tpu.memory_space<vmem>>, %arg2: memref<8x1xi32, #tpu.memory_space<vmem>>, %arg3: memref<1x128xf32, #tpu.memory_space<vmem>>) attributes {dimension_semantics = [#tpu.dimension_semantics<parallel>], iteration_bounds = array<i64: 1>, scalar_prefetch = 0 : i64, scratch_operands = 0 : i64, tpu.core_type = #tpu.core_type<tc>, window_params = [{transform_indices = @transform_0, window_bounds = array<i64: 8, 16>}, {transform_indices = @transform_1, window_bounds = array<i64: 8, 1>}, {transform_indices = @transform_2, window_bounds = array<i64: 1, 128>}]} {
    %c0 = arith.constant 0 : index
    %c0_0 = arith.constant 0 : index
    %0 = vector.load %arg1[%c0, %c0_0] : memref<8x16xf32, #tpu.memory_space<vmem>>, vector<8x16xf32>
    %1 = tpu.iota {dimensions = array<i32: 1>} : vector<8x16xi32>
    %c0_1 = arith.constant 0 : index
    %c0_2 = arith.constant 0 : index
    %2 = vector.load %arg2[%c0_1, %c0_2] : memref<8x1xi32, #tpu.memory_space<vmem>>, vector<8x1xi32>
    %3 = vector.broadcast %2 : vector<8x1xi32> to vector<8x16xi32>
    %4 = arith.cmpi eq, %1, %3 : vector<8x16xi32>
    %cst = arith.constant dense<0.000000e+00> : vector<8xf32>
    %5 = vector.multi_reduction <add>, %0, %cst [1] : vector<8x16xf32> to vector<8xf32>
    %6 = vector.shape_cast %5 : vector<8xf32> to vector<8x1xf32>
    %cst_3 = arith.constant 9.99999997E-7 : f32
    %7 = vector.broadcast %cst_3 : f32 to vector<8x1xf32>
    %8 = arith.addf %6, %7 : vector<8x1xf32>
    %cst_4 = arith.constant 1.000000e+00 : f32
    %9 = vector.broadcast %cst_4 : f32 to vector<8x1xf32>
    %10 = arith.divf %9, %8 : vector<8x1xf32>
    %11 = vector.broadcast %10 : vector<8x1xf32> to vector<8x16xf32>
    %12 = arith.mulf %0, %11 : vector<8x16xf32>
    %cst_5 = arith.constant 0.000000e+00 : f32
    %13 = vector.broadcast %cst_5 : f32 to vector<8x16xf32>
    %14 = arith.select %4, %12, %13 : vector<8x16xi1>, vector<8x16xf32>
    %cst_6 = arith.constant dense<0.000000e+00> : vector<8xf32>
    %15 = vector.multi_reduction <add>, %14, %cst_6 [1] : vector<8x16xf32> to vector<8xf32>
    %16 = vector.shape_cast %15 : vector<8xf32> to vector<8x1xf32>
    %cst_7 = arith.constant 0.000000e+00 : f32
    %17 = vector.broadcast %cst_7 : f32 to vector<8x16xf32>
    %18 = arith.select %4, %17, %12 : vector<8x16xi1>, vector<8x16xf32>
    %cst_8 = arith.constant dense<0xFF800000> : vector<8xf32>
    %19 = vector.multi_reduction <maximumf>, %18, %cst_8 [1] : vector<8x16xf32> to vector<8xf32>
    %20 = vector.shape_cast %19 : vector<8xf32> to vector<8x1xf32>
    %cst_9 = arith.constant 1.000000e+00 : f32
    %21 = vector.broadcast %cst_9 : f32 to vector<8x1xf32>
    %22 = arith.subf %21, %16 : vector<8x1xf32>
    %23 = arith.addf %22, %20 : vector<8x1xf32>
    %cst_10 = arith.constant 0.000000e+00 : f32
    %24 = vector.broadcast %cst_10 : f32 to vector<8x1xf32>
    %25 = arith.maximumf %23, %24 : vector<8x1xf32>
    %26 = tpu.iota {dimensions = array<i32: 0>} : vector<8x1xi32>
    %c8_i32 = arith.constant 8 : i32
    %27 = arith.muli %arg0, %c8_i32 : i32
    %28 = vector.broadcast %27 : i32 to vector<8x1xi32>
    %29 = arith.addi %28, %26 : vector<8x1xi32>
    %c8_i32_11 = arith.constant 8 : i32
    %30 = vector.broadcast %c8_i32_11 : i32 to vector<8x1xi32>
    %31 = arith.cmpi slt, %29, %30 : vector<8x1xi32>
    %cst_12 = arith.constant 0.000000e+00 : f32
    %32 = vector.broadcast %cst_12 : f32 to vector<8x1xf32>
    %33 = arith.select %31, %25, %32 : vector<8x1xi1>, vector<8x1xf32>
    %34 = vector.shape_cast %33 : vector<8x1xf32> to vector<1x8x1xf32>
    %cst_13 = arith.constant dense<0.000000e+00> : vector<1xf32>
    %35 = vector.multi_reduction <add>, %34, %cst_13 [1, 2] : vector<1x8x1xf32> to vector<1xf32>
    %36 = vector.shape_cast %35 : vector<1xf32> to vector<1x1x1xf32>
    %37 = vector.extract %36[0, 0, 0] : f32 from vector<1x1x1xf32>
    %38 = vector.broadcast %37 : f32 to vector<1x128xf32>
    %c0_14 = arith.constant 0 : index
    %c0_15 = arith.constant 0 : index
    %39 = vector.load %arg3[%c0_14, %c0_15] : memref<1x128xf32, #tpu.memory_space<vmem>>, vector<1x128xf32>
    tpu.vector_store %arg3[%c0_14, %c0_15], %38 {strides = array<i32>} : memref<1x128xf32, #tpu.memory_space<vmem>>, vector<1x128xf32>,
    return
  }
  func.func @transform_0(%arg0: i32) -> (i32, i32) {
    %c0_i32 = arith.constant 0 : i32
    %c0_i32_0 = arith.constant 0 : i32
    return %arg0, %c0_i32 : i32, i32
  }
  func.func @transform_1(%arg0: i32) -> (i32, i32) {
    %c0_i32 = arith.constant 0 : i32
    %c0_i32_0 = arith.constant 0 : i32
    return %arg0, %c0_i32 : i32, i32
  }
  func.func @transform_2(%arg0: i32) -> (i32, i32) {
    %c0_i32 = arith.constant 0 : i32
    %c0_i32_0 = arith.constant 0 : i32
    return %c0_i32, %arg0 : i32, i32
  }
}

</mosaic_0001>

<llo_original>
// kernel: tpu_custom_call.1
$region0: #{tpu_custom_call.1}
  #allocation0 [shape = 'u32[]', space=smem, size = 0x4, offset = 0x4, fixed_abs, tag = 'smem constant byte address 0x4 - core index']
  #allocation1 [shape = 'u32[144,128]{1,0:T(1,128)}', space=vmem, size = 0x12000, scoped, tag = 'internal scratch']
  %s0 = inlined_call_operand.vmem [shape: f32[8,16], index: 0, kind: input, shape index: {}]
  %s1 = inlined_call_operand.vmem [shape: s32[8,1], index: 1, kind: input, shape index: {}]
  %s2 = inlined_call_operand.hbm [shape: f32[1,128], index: 2, kind: output, shape index: {}]
  %s3 = sld [smem:[#allocation0]]
  $region18: #{tpu_custom_call.1} parent=0
    _
  %s5 = ssub.s32 1, %s3
  %s6 = scalar_select 0, %s5, %s3
  $region1: #{tpu_custom_call.1} parent=0
    #allocation2 [shape = 'u8[512]{0}', space=vmem, size = 0x400, scoped, tag = 'output window, operand 0, single buffered']
    #allocation3 [shape = 's32[1]{0}', space=sflag, size = 0x4, scoped, tag = 'scoped memory for tpu_custom_call.1']
    %7 = vsyncpa [#allocation3], 0
    // Predicated region
    $region2: #{tpu_custom_call.1} parent=1 // pred_check
      _
    $region3: #{tpu_custom_call.1} parent=1 // pred_check_branch
      %9 = sbr.rel (0) target = $region5
    $region4: #{tpu_custom_call.1} parent=1 // pred_region
      _
    $region5: #{tpu_custom_call.1} parent=1 // pred_fallthru
      _
    // Predicated region
    $region6: #{tpu_custom_call.1} parent=1 // pred_check
      _
    $region7: #{tpu_custom_call.1} parent=1 // pred_check_branch
      %11 = sbr.rel (0) target = $region9
    $region8: #{tpu_custom_call.1} parent=1 // pred_region
      _
    $region9: #{tpu_custom_call.1} parent=1 // pred_fallthru
      _
    %v12 = vld [vmem:[%s0] sm:$0xff]
    %v13 = vlaneseq
    %v14 = vand.u32 %v13, 127
    %v15 = vld [vmem:[%s1] sm:$0xff]
    %16 = vset.pattern.permute.xlu0 0
    %17 = vperm.xlu0 %16, %v15
    %v18 = vpop.permute.xlu0 %17
    %vm19 = vcmp.eq.s32.totalorder %v14, %v18
    %vm20 = vcmask 130048
    %v21 = vsel %vm20, %v12, 0.0
    %22 = vadd.xlane.f32.xlu0 %v21
    %v23 = vpop.xlane.xlu0 %22
    %v24 = vadd.f32 %v23, 1e-06
    %v25 = vrcp.pop %v24
    %v26 = vmul.f32 1.0, %v25
    %v27 = vmul.f32 %v12, %v26
    %v28 = vsel %vm19, %v27, 0.0
    %v29 = vsel %vm20, %v28, 0.0
    %30 = vadd.xlane.f32.xlu0 %v29
    %v31 = vpop.xlane.xlu0 %30
    %v32 = vsel %vm19, 0.0, %v27
    %v33 = vsel %vm20, %v32, -inf
    %34 = vmax.xlane.f32.xlu0 %v33
    %v35 = vpop.xlane.xlu0 %34
    %v36 = vsub.f32 1.0, %v31
    %v37 = vadd.f32 %v36, %v35
    %v38 = vmax.f32 %v37, 0.0
    %v39 = vlaneseq
    %v40 = vshrl.u32 %v39, 7
    %s41 = smul.u32 0, 8
    %v42 = vstv %s41
    %v43 = vadd.s32 %v42, %v40
    %vm44 = vcmp.lt.s32.totalorder %v43, 8
    %v45 = vsel %vm44, %v38, 0.0
    %vm46 = vcmask 7168
    %v47 = vsel %vm46, %v45, 0.0
    %48 = vadd.xlane.f32.xlu0 %v47
    %v49 = vpop.xlane.xlu0 %48
    %v50 = vrot.slane %v49, 4
    %v51 = vadd.f32 %v49, %v50
    %v52 = vrot.slane %v51, 2
    %v53 = vadd.f32 %v51, %v52
    %v54 = vrot.slane %v53, 1
    %v55 = vadd.f32 %v53, %v54
    %s56 = vtos %v55
    %v57 = vstv %s56
    %58 = vst [vmem:[#allocation2] sm:$0x1] %v57
    // Predicated region
    $region10: #{tpu_custom_call.1} parent=1 // pred_check
      _
    $region11: #{tpu_custom_call.1} parent=1 // pred_check_branch
      %60 = sbr.rel (0) target = $region13
    $region12: #{tpu_custom_call.1} parent=1 // pred_region
      %s62 = ssub.s32 16, 16
      %63 = vsyncadd [#allocation3], %s62
      %s65 = sshll.u32 [#allocation2], 4
      %s66 = int_to_ptr.vmem [resolvable:$true] %s65
      %68 = dma.vmem_to_hbm [thread:$0]  %s66, 16, %s2, [#allocation3]
    $region13: #{tpu_custom_call.1} parent=1 // pred_fallthru
      _
    // Predicated region
    $region14: #{tpu_custom_call.1} parent=1 // pred_check
      _
    $region15: #{tpu_custom_call.1} parent=1 // pred_check_branch
      %70 = sbr.rel (0) target = $region17
    $region16: #{tpu_custom_call.1} parent=1 // pred_region
      %71 = dma.done [#allocation3], 16
    $region17: #{tpu_custom_call.1} parent=1 // pred_fallthru
      _
    %72 = vsyncpa [#allocation3], 1

</llo_original>
